<compile_context>
chip_gen: v5e
topology: v5e:2x2
jax: 0.10.0
libtpu: 0.0.40
codegen_flags: <defaults>
</compile_context>

<pallas_src>
import numpy as np
import jax
import jax.numpy as jnp
from jax.experimental import pallas as pl
from jax.experimental.pallas import tpu as pltpu

# Deterministic stand-ins for global_variables.*_REWARD_WEIGHT
MP_REWARD_WEIGHT = 1.0
PPL_REWARD_WEIGHT = 0.5
Z1_REWARD_WEIGHT = 2.0
Z2_REWARD_WEIGHT = 2.0
Z3_REWARD_WEIGHT = 1.0
UNK_REWARD_WEIGHT = 3.0


def _tag_loss_kernel(len_ref, pred_ref, sg_ref, sg1_ref, sel_ref, pb_ref,
                     mp_ref, logppl_ref, bl_ref, out_ref):
    B, S = pred_ref.shape

    j = jax.lax.broadcasted_iota(jnp.int32, (B, S), 1)      # position index
    L = len_ref[...]                                        # (B,1) int32
    valid = j < L                                           # (B,S) bool

    pred = pred_ref[...]
    sg = sg_ref[...]
    sg1 = sg1_ref[...]
    sel = sel_ref[...]

    # reward_diff / reward_same counts, masked to the sentence length.
    # Boolean compare is AND-ed with the length mask and cast once per term.
    z1 = jnp.sum(((pred != sg) & valid).astype(jnp.float32), axis=1, keepdims=True)
    z2 = jnp.sum(((pred != sg1) & valid).astype(jnp.float32), axis=1, keepdims=True)
    z3 = 0.01 * jnp.sum(((sg == sg1) & valid).astype(jnp.float32), axis=1, keepdims=True)

    # unk rate: fraction of zeros in sel[:L].  Precondition: L[i] >= 1 (matches
    # the reference, which also divides by the raw length).
    Lf = L.astype(jnp.float32)
    unk = -jnp.sum(((sel == 0) & valid).astype(jnp.float32), axis=1, keepdims=True) / Lf

    mp = mp_ref[...]                                        # (B,1)
    ppl = -jnp.exp(logppl_ref[...])                         # (B,1)

    rewards = (mp * MP_REWARD_WEIGHT
               + ppl * PPL_REWARD_WEIGHT
               + z1 * Z1_REWARD_WEIGHT
               + z2 * Z2_REWARD_WEIGHT
               + z3 * Z3_REWARD_WEIGHT
               + unk * UNK_REWARD_WEIGHT) * 0.001            # (B,1)

    # REINFORCE-style masked loss over the sequence, factored so only one
    # (B,S) multiply feeds one lane reduce.  j < min(L+1, S)  <=>  j <= L.
    wgt3 = (j <= L).astype(jnp.float32)                      # (B,S)
    row = jnp.sum(pb_ref[...] * wgt3, axis=1, keepdims=True)  # (B,1)
    cnt3 = jnp.sum(jnp.minimum(Lf + 1.0, float(S)))           # scalar == sum(wgt3)
    bl = bl_ref[0]
    loss_col = -row * (rewards - bl) * (1.0 / cnt3)           # (B,1); batch-sum == loss

    # Fuse all per-batch means (and the loss) into one (B, 8) tile -> one
    # cross-sublane reduce -> one (1, 8) vector store.
    inv_b = 1.0 / B
    cols = (
        loss_col,
        z1 * (Z1_REWARD_WEIGHT * inv_b),
        z2 * (Z2_REWARD_WEIGHT * inv_b),
        z3 * (Z3_REWARD_WEIGHT * inv_b),
        mp * (MP_REWARD_WEIGHT * inv_b),
        ppl * (PPL_REWARD_WEIGHT * inv_b),
        unk * (UNK_REWARD_WEIGHT * inv_b),
        rewards * inv_b,                                     # rewards_ave (baseline)
    )
    col_idx = jax.lax.broadcasted_iota(jnp.int32, (B, 8), 1)
    stacked = jnp.zeros((B, 8), jnp.float32)
    for k, c in enumerate(cols):
        stacked = stacked + jnp.where(col_idx == k, c, 0.0)
    out_ref[...] = jnp.sum(stacked, axis=0, keepdims=True)   # (1,8)


@jax.jit
def _forward_jit(stc_length_out, predicted_out, sudo_golden_out, sudo_golden_out_1,
                 sel, pb, meaning_preservation, logppl, bl, bn):
    B, S = sel.shape
    lengths2d = stc_length_out.reshape(B, 1).astype(jnp.int32)
    mp2d = meaning_preservation.reshape(B, 1).astype(jnp.float32)
    logppl2d = logppl.reshape(B, 1).astype(jnp.float32)
    bl_arr = jnp.reshape(bl, (1,)).astype(jnp.float32)

    vmem = pl.BlockSpec(memory_space=pltpu.MemorySpace.VMEM)
    smem = pl.BlockSpec(memory_space=pltpu.MemorySpace.SMEM)

    out = pl.pallas_call(
        _tag_loss_kernel,
        out_shape=jax.ShapeDtypeStruct((1, 8), jnp.float32),
        in_specs=[vmem, vmem, vmem, vmem, vmem, vmem, vmem, vmem, smem],
        out_specs=vmem,
    )(lengths2d,
      predicted_out.astype(jnp.int32),
      sudo_golden_out.astype(jnp.int32),
      sudo_golden_out_1.astype(jnp.int32),
      sel.astype(jnp.int32),
      pb.astype(jnp.float32),
      mp2d, logppl2d, bl_arr)

    out = out.reshape(8)
    stats = out[:7]          # (loss, z1*W1, z2*W2, z3*W3, mp*WMP, ppl*WPPL, unk*WUNK)
    rewards_ave = out[7]
    new_bl = (bl * bn + rewards_ave) / (bn + 1.0)            # on-device baseline update
    new_bn = bn + 1.0
    return stats, new_bl, new_bn


class TagLossBiafRLPallas:
    """JAX/Pallas port of TagLossBiafRL.forward (baseline kept on device)."""

    def __init__(self):
        self.bl = jnp.zeros((), jnp.float32)
        self.bn = jnp.zeros((), jnp.float32)

    def forward(self, sel, pb, predicted_out, stc_length_out,
                sudo_golden_out, sudo_golden_out_1,
                meaning_preservation, logppl):
        # Fully async: returns a (7,) device array; no host sync per step.
        stats, self.bl, self.bn = _forward_jit(
            stc_length_out, predicted_out, sudo_golden_out, sudo_golden_out_1,
            sel, pb, meaning_preservation, logppl, self.bl, self.bn)
        return stats


def _reference_forward(sel, pb, pred, lengths, sg, sg1, mp, logppl, bl):
    """Pure-numpy reference mirroring the PyTorch forward semantics."""
    sel = np.asarray(sel); pb = np.asarray(pb); pred = np.asarray(pred)
    lengths = np.asarray(lengths); sg = np.asarray(sg); sg1 = np.asarray(sg1)
    mp = np.asarray(mp); logppl = np.asarray(logppl)
    B, S = sel.shape
    z1 = np.array([np.sum(pred[i, :lengths[i]] != sg[i, :lengths[i]]) for i in range(B)], dtype=np.float64)
    z2 = np.array([np.sum(pred[i, :lengths[i]] != sg1[i, :lengths[i]]) for i in range(B)], dtype=np.float64)
    z3 = np.array([np.sum(sg[i, :lengths[i]] == sg1[i, :lengths[i]]) for i in range(B)], dtype=np.float64) * 0.01
    unk = np.array([-np.sum(sel[i, :lengths[i]] == 0) / float(lengths[i]) for i in range(B)], dtype=np.float64)
    ppl = -np.exp(logppl.astype(np.float64))
    rewards = (mp * MP_REWARD_WEIGHT + ppl * PPL_REWARD_WEIGHT + z1 * Z1_REWARD_WEIGHT
               + z2 * Z2_REWARD_WEIGHT + z3 * Z3_REWARD_WEIGHT + unk * UNK_REWARD_WEIGHT) * 0.001
    ls3 = 0.0
    cnt3 = 0
    for j in range(S):
        wgt3 = np.array([1.0 if j < min(lengths[i] + 1, S) else 0.0 for i in range(B)])
        ls3 += np.sum(-pb[:, j] * (rewards - bl) * wgt3)
        cnt3 += np.sum(wgt3)
    loss = ls3 / cnt3
    return (loss,
            np.average(z1) * Z1_REWARD_WEIGHT,
            np.average(z2) * Z2_REWARD_WEIGHT,
            np.average(z3) * Z3_REWARD_WEIGHT,
            np.average(mp) * MP_REWARD_WEIGHT,
            np.average(ppl) * PPL_REWARD_WEIGHT,
            np.average(unk) * UNK_REWARD_WEIGHT)


if __name__ == "__main__":
    B, S, VOCAB = 8, 128, 16

    key = jax.random.PRNGKey(0)
    k1, k2, k3, k4, k5, k6, k7, k8 = jax.random.split(key, 8)

    stc_length_out = jax.random.randint(k1, (B,), 4, S - 1, dtype=jnp.int32)
    sel = jax.random.randint(k2, (B, S), 0, VOCAB, dtype=jnp.int32)        # 0 == UNK id
    predicted_out = jax.random.randint(k3, (B, S), 0, 4, dtype=jnp.int32)   # small range -> matches exist
    sudo_golden_out = jax.random.randint(k4, (B, S), 0, 4, dtype=jnp.int32)
    sudo_golden_out_1 = jax.random.randint(k5, (B, S), 0, 4, dtype=jnp.int32)
    pb = jax.random.normal(k6, (B, S), dtype=jnp.float32)                   # log-probs of selections
    meaning_preservation = jax.random.uniform(k7, (B,), dtype=jnp.float32)
    logppl = jax.random.uniform(k8, (B,), minval=-1.0, maxval=1.0, dtype=jnp.float32)

    module = TagLossBiafRLPallas()
    stats = module.forward(sel, pb, predicted_out, stc_length_out,
                           sudo_golden_out, sudo_golden_out_1,
                           meaning_preservation, logppl)
    stats = jax.block_until_ready(stats)
    result = np.asarray(stats)          # single device->host transfer

    ref = _reference_forward(sel, pb, predicted_out, stc_length_out,
                             sudo_golden_out, sudo_golden_out_1,
                             meaning_preservation, logppl, bl=0.0)

    np.testing.assert_allclose(result, np.array(ref), rtol=1e-4, atol=1e-5)
    print("KERNEL_OK")
</pallas_src>

<mosaic_0001>
module attributes {stable_mosaic.version = 11 : i64} {
  func.func @_tag_loss_kernel(%arg0: memref<8x1xi32, #tpu.memory_space<vmem>>, %arg1: memref<8x128xi32, #tpu.memory_space<vmem>>, %arg2: memref<8x128xi32, #tpu.memory_space<vmem>>, %arg3: memref<8x128xi32, #tpu.memory_space<vmem>>, %arg4: memref<8x128xi32, #tpu.memory_space<vmem>>, %arg5: memref<8x128xf32, #tpu.memory_space<vmem>>, %arg6: memref<8x1xf32, #tpu.memory_space<vmem>>, %arg7: memref<8x1xf32, #tpu.memory_space<vmem>>, %arg8: memref<1xf32, #tpu.memory_space<smem>>, %arg9: memref<1x8xf32, #tpu.memory_space<vmem>>) attributes {dimension_semantics = [], scalar_prefetch = 0 : i64, scratch_operands = 0 : i64, tpu.core_type = #tpu.core_type<tc>} {
    %0 = tpu.iota {dimensions = array<i32: 1>} : vector<8x128xi32>
    %c0 = arith.constant 0 : index
    %c0_0 = arith.constant 0 : index
    %1 = vector.load %arg0[%c0, %c0_0] : memref<8x1xi32, #tpu.memory_space<vmem>>, vector<8x1xi32>
    %2 = vector.broadcast %1 : vector<8x1xi32> to vector<8x128xi32>
    %3 = arith.cmpi slt, %0, %2 : vector<8x128xi32>
    %c0_1 = arith.constant 0 : index
    %c0_2 = arith.constant 0 : index
    %4 = vector.load %arg1[%c0_1, %c0_2] : memref<8x128xi32, #tpu.memory_space<vmem>>, vector<8x128xi32>
    %c0_3 = arith.constant 0 : index
    %c0_4 = arith.constant 0 : index
    %5 = vector.load %arg2[%c0_3, %c0_4] : memref<8x128xi32, #tpu.memory_space<vmem>>, vector<8x128xi32>
    %c0_5 = arith.constant 0 : index
    %c0_6 = arith.constant 0 : index
    %6 = vector.load %arg3[%c0_5, %c0_6] : memref<8x128xi32, #tpu.memory_space<vmem>>, vector<8x128xi32>
    %c0_7 = arith.constant 0 : index
    %c0_8 = arith.constant 0 : index
    %7 = vector.load %arg4[%c0_7, %c0_8] : memref<8x128xi32, #tpu.memory_space<vmem>>, vector<8x128xi32>
    %8 = arith.cmpi ne, %4, %5 : vector<8x128xi32>
    %9 = arith.andi %8, %3 : vector<8x128xi1>
    %10 = arith.extui %9 : vector<8x128xi1> to vector<8x128xi32>
    %11 = arith.sitofp %10 : vector<8x128xi32> to vector<8x128xf32>
    %cst = arith.constant dense<0.000000e+00> : vector<8xf32>
    %12 = vector.multi_reduction <add>, %11, %cst [1] : vector<8x128xf32> to vector<8xf32>
    %13 = vector.shape_cast %12 : vector<8xf32> to vector<8x1xf32>
    %14 = arith.cmpi ne, %4, %6 : vector<8x128xi32>
    %15 = arith.andi %14, %3 : vector<8x128xi1>
    %16 = arith.extui %15 : vector<8x128xi1> to vector<8x128xi32>
    %17 = arith.sitofp %16 : vector<8x128xi32> to vector<8x128xf32>
    %cst_9 = arith.constant dense<0.000000e+00> : vector<8xf32>
    %18 = vector.multi_reduction <add>, %17, %cst_9 [1] : vector<8x128xf32> to vector<8xf32>
    %19 = vector.shape_cast %18 : vector<8xf32> to vector<8x1xf32>
    %20 = arith.cmpi eq, %5, %6 : vector<8x128xi32>
    %21 = arith.andi %20, %3 : vector<8x128xi1>
    %22 = arith.extui %21 : vector<8x128xi1> to vector<8x128xi32>
    %23 = arith.sitofp %22 : vector<8x128xi32> to vector<8x128xf32>
    %cst_10 = arith.constant dense<0.000000e+00> : vector<8xf32>
    %24 = vector.multi_reduction <add>, %23, %cst_10 [1] : vector<8x128xf32> to vector<8xf32>
    %25 = vector.shape_cast %24 : vector<8xf32> to vector<8x1xf32>
    %cst_11 = arith.constant 0.00999999977 : f32
    %26 = vector.broadcast %cst_11 : f32 to vector<8x1xf32>
    %27 = arith.mulf %26, %25 : vector<8x1xf32>
    %28 = arith.sitofp %1 : vector<8x1xi32> to vector<8x1xf32>
    %c0_i32 = arith.constant 0 : i32
    %29 = vector.broadcast %c0_i32 : i32 to vector<8x128xi32>
    %30 = arith.cmpi eq, %7, %29 : vector<8x128xi32>
    %31 = arith.andi %30, %3 : vector<8x128xi1>
    %32 = arith.extui %31 : vector<8x128xi1> to vector<8x128xi32>
    %33 = arith.sitofp %32 : vector<8x128xi32> to vector<8x128xf32>
    %cst_12 = arith.constant dense<0.000000e+00> : vector<8xf32>
    %34 = vector.multi_reduction <add>, %33, %cst_12 [1] : vector<8x128xf32> to vector<8xf32>
    %35 = vector.shape_cast %34 : vector<8xf32> to vector<8x1xf32>
    %cst_13 = arith.constant 0.000000e+00 : f32
    %36 = vector.broadcast %cst_13 : f32 to vector<8x1xf32>
    %37 = arith.subf %36, %35 : vector<8x1xf32>
    %38 = arith.divf %37, %28 : vector<8x1xf32>
    %c0_14 = arith.constant 0 : index
    %c0_15 = arith.constant 0 : index
    %39 = vector.load %arg6[%c0_14, %c0_15] : memref<8x1xf32, #tpu.memory_space<vmem>>, vector<8x1xf32>
    %c0_16 = arith.constant 0 : index
    %c0_17 = arith.constant 0 : index
    %40 = vector.load %arg7[%c0_16, %c0_17] : memref<8x1xf32, #tpu.memory_space<vmem>>, vector<8x1xf32>
    %41 = math.exp %40 : vector<8x1xf32>
    %cst_18 = arith.constant 0.000000e+00 : f32
    %42 = vector.broadcast %cst_18 : f32 to vector<8x1xf32>
    %43 = arith.subf %42, %41 : vector<8x1xf32>
    %cst_19 = arith.constant 1.000000e+00 : f32
    %44 = vector.broadcast %cst_19 : f32 to vector<8x1xf32>
    %45 = arith.mulf %39, %44 : vector<8x1xf32>
    %cst_20 = arith.constant 5.000000e-01 : f32
    %46 = vector.broadcast %cst_20 : f32 to vector<8x1xf32>
    %47 = arith.mulf %43, %46 : vector<8x1xf32>
    %48 = arith.addf %45, %47 : vector<8x1xf32>
    %cst_21 = arith.constant 2.000000e+00 : f32
    %49 = vector.broadcast %cst_21 : f32 to vector<8x1xf32>
    %50 = arith.mulf %13, %49 : vector<8x1xf32>
    %51 = arith.addf %48, %50 : vector<8x1xf32>
    %cst_22 = arith.constant 2.000000e+00 : f32
    %52 = vector.broadcast %cst_22 : f32 to vector<8x1xf32>
    %53 = arith.mulf %19, %52 : vector<8x1xf32>
    %54 = arith.addf %51, %53 : vector<8x1xf32>
    %cst_23 = arith.constant 1.000000e+00 : f32
    %55 = vector.broadcast %cst_23 : f32 to vector<8x1xf32>
    %56 = arith.mulf %27, %55 : vector<8x1xf32>
    %57 = arith.addf %54, %56 : vector<8x1xf32>
    %cst_24 = arith.constant 3.000000e+00 : f32
    %58 = vector.broadcast %cst_24 : f32 to vector<8x1xf32>
    %59 = arith.mulf %38, %58 : vector<8x1xf32>
    %60 = arith.addf %57, %59 : vector<8x1xf32>
    %cst_25 = arith.constant 1.000000e-03 : f32
    %61 = vector.broadcast %cst_25 : f32 to vector<8x1xf32>
    %62 = arith.mulf %60, %61 : vector<8x1xf32>
    %63 = vector.broadcast %1 : vector<8x1xi32> to vector<8x128xi32>
    %64 = arith.cmpi sle, %0, %63 : vector<8x128xi32>
    %65 = arith.extui %64 : vector<8x128xi1> to vector<8x128xi32>
    %66 = arith.sitofp %65 : vector<8x128xi32> to vector<8x128xf32>
    %c0_26 = arith.constant 0 : index
    %c0_27 = arith.constant 0 : index
    %67 = vector.load %arg5[%c0_26, %c0_27] : memref<8x128xf32, #tpu.memory_space<vmem>>, vector<8x128xf32>
    %68 = arith.mulf %67, %66 : vector<8x128xf32>
    %cst_28 = arith.constant dense<0.000000e+00> : vector<8xf32>
    %69 = vector.multi_reduction <add>, %68, %cst_28 [1] : vector<8x128xf32> to vector<8xf32>
    %70 = vector.shape_cast %69 : vector<8xf32> to vector<8x1xf32>
    %cst_29 = arith.constant 1.000000e+00 : f32
    %71 = vector.broadcast %cst_29 : f32 to vector<8x1xf32>
    %72 = arith.addf %28, %71 : vector<8x1xf32>
    %cst_30 = arith.constant 1.280000e+02 : f32
    %73 = vector.broadcast %cst_30 : f32 to vector<8x1xf32>
    %74 = arith.minimumf %72, %73 : vector<8x1xf32>
    %75 = vector.shape_cast %74 : vector<8x1xf32> to vector<1x8x1xf32>
    %cst_31 = arith.constant dense<0.000000e+00> : vector<1xf32>
    %76 = vector.multi_reduction <add>, %75, %cst_31 [1, 2] : vector<1x8x1xf32> to vector<1xf32>
    %77 = vector.shape_cast %76 : vector<1xf32> to vector<1x1x1xf32>
    %78 = vector.extract %77[0, 0, 0] : f32 from vector<1x1x1xf32>
    %c0_32 = arith.constant 0 : index
    %79 = memref.load %arg8[%c0_32] : memref<1xf32, #tpu.memory_space<smem>>
    %cst_33 = arith.constant 0.000000e+00 : f32
    %80 = vector.broadcast %cst_33 : f32 to vector<8x1xf32>
    %81 = arith.subf %80, %70 : vector<8x1xf32>
    %82 = vector.broadcast %79 : f32 to vector<8x1xf32>
    %83 = arith.subf %62, %82 : vector<8x1xf32>
    %84 = arith.mulf %81, %83 : vector<8x1xf32>
    %cst_34 = arith.constant 1.000000e+00 : f32
    %85 = arith.divf %cst_34, %78 : f32
    %86 = vector.broadcast %85 : f32 to vector<8x1xf32>
    %87 = arith.mulf %84, %86 : vector<8x1xf32>
    %cst_35 = arith.constant 2.500000e-01 : f32
    %88 = vector.broadcast %cst_35 : f32 to vector<8x1xf32>
    %89 = arith.mulf %13, %88 : vector<8x1xf32>
    %cst_36 = arith.constant 2.500000e-01 : f32
    %90 = vector.broadcast %cst_36 : f32 to vector<8x1xf32>
    %91 = arith.mulf %19, %90 : vector<8x1xf32>
    %cst_37 = arith.constant 1.250000e-01 : f32
    %92 = vector.broadcast %cst_37 : f32 to vector<8x1xf32>
    %93 = arith.mulf %27, %92 : vector<8x1xf32>
    %cst_38 = arith.constant 1.250000e-01 : f32
    %94 = vector.broadcast %cst_38 : f32 to vector<8x1xf32>
    %95 = arith.mulf %39, %94 : vector<8x1xf32>
    %cst_39 = arith.constant 6.250000e-02 : f32
    %96 = vector.broadcast %cst_39 : f32 to vector<8x1xf32>
    %97 = arith.mulf %43, %96 : vector<8x1xf32>
    %cst_40 = arith.constant 3.750000e-01 : f32
    %98 = vector.broadcast %cst_40 : f32 to vector<8x1xf32>
    %99 = arith.mulf %38, %98 : vector<8x1xf32>
    %cst_41 = arith.constant 1.250000e-01 : f32
    %100 = vector.broadcast %cst_41 : f32 to vector<8x1xf32>
    %101 = arith.mulf %62, %100 : vector<8x1xf32>
    %102 = tpu.iota {dimensions = array<i32: 1>} : vector<8x8xi32>
    %cst_42 = arith.constant 0.000000e+00 : f32
    %103 = vector.broadcast %cst_42 : f32 to vector<8x8xf32>
    %c0_i32_43 = arith.constant 0 : i32
    %104 = vector.broadcast %c0_i32_43 : i32 to vector<8x8xi32>
    %105 = arith.cmpi eq, %102, %104 : vector<8x8xi32>
    %cst_44 = arith.constant 0.000000e+00 : f32
    %106 = vector.shape_cast %87 : vector<8x1xf32> to vector<8x1xf32>
    %107 = vector.broadcast %106 : vector<8x1xf32> to vector<8x8xf32>
    %108 = vector.broadcast %cst_44 : f32 to vector<8x8xf32>
    %109 = arith.select %105, %107, %108 : vector<8x8xi1>, vector<8x8xf32>
    %110 = arith.addf %103, %109 : vector<8x8xf32>
    %c1_i32 = arith.constant 1 : i32
    %111 = vector.broadcast %c1_i32 : i32 to vector<8x8xi32>
    %112 = arith.cmpi eq, %102, %111 : vector<8x8xi32>
    %cst_45 = arith.constant 0.000000e+00 : f32
    %113 = vector.shape_cast %89 : vector<8x1xf32> to vector<8x1xf32>
    %114 = vector.broadcast %113 : vector<8x1xf32> to vector<8x8xf32>
    %115 = vector.broadcast %cst_45 : f32 to vector<8x8xf32>
    %116 = arith.select %112, %114, %115 : vector<8x8xi1>, vector<8x8xf32>
    %117 = arith.addf %110, %116 : vector<8x8xf32>
    %c2_i32 = arith.constant 2 : i32
    %118 = vector.broadcast %c2_i32 : i32 to vector<8x8xi32>
    %119 = arith.cmpi eq, %102, %118 : vector<8x8xi32>
    %cst_46 = arith.constant 0.000000e+00 : f32
    %120 = vector.shape_cast %91 : vector<8x1xf32> to vector<8x1xf32>
    %121 = vector.broadcast %120 : vector<8x1xf32> to vector<8x8xf32>
    %122 = vector.broadcast %cst_46 : f32 to vector<8x8xf32>
    %123 = arith.select %119, %121, %122 : vector<8x8xi1>, vector<8x8xf32>
    %124 = arith.addf %117, %123 : vector<8x8xf32>
    %c3_i32 = arith.constant 3 : i32
    %125 = vector.broadcast %c3_i32 : i32 to vector<8x8xi32>
    %126 = arith.cmpi eq, %102, %125 : vector<8x8xi32>
    %cst_47 = arith.constant 0.000000e+00 : f32
    %127 = vector.shape_cast %93 : vector<8x1xf32> to vector<8x1xf32>
    %128 = vector.broadcast %127 : vector<8x1xf32> to vector<8x8xf32>
    %129 = vector.broadcast %cst_47 : f32 to vector<8x8xf32>
    %130 = arith.select %126, %128, %129 : vector<8x8xi1>, vector<8x8xf32>
    %131 = arith.addf %124, %130 : vector<8x8xf32>
    %c4_i32 = arith.constant 4 : i32
    %132 = vector.broadcast %c4_i32 : i32 to vector<8x8xi32>
    %133 = arith.cmpi eq, %102, %132 : vector<8x8xi32>
    %cst_48 = arith.constant 0.000000e+00 : f32
    %134 = vector.shape_cast %95 : vector<8x1xf32> to vector<8x1xf32>
    %135 = vector.broadcast %134 : vector<8x1xf32> to vector<8x8xf32>
    %136 = vector.broadcast %cst_48 : f32 to vector<8x8xf32>
    %137 = arith.select %133, %135, %136 : vector<8x8xi1>, vector<8x8xf32>
    %138 = arith.addf %131, %137 : vector<8x8xf32>
    %c5_i32 = arith.constant 5 : i32
    %139 = vector.broadcast %c5_i32 : i32 to vector<8x8xi32>
    %140 = arith.cmpi eq, %102, %139 : vector<8x8xi32>
    %cst_49 = arith.constant 0.000000e+00 : f32
    %141 = vector.shape_cast %97 : vector<8x1xf32> to vector<8x1xf32>
    %142 = vector.broadcast %141 : vector<8x1xf32> to vector<8x8xf32>
    %143 = vector.broadcast %cst_49 : f32 to vector<8x8xf32>
    %144 = arith.select %140, %142, %143 : vector<8x8xi1>, vector<8x8xf32>
    %145 = arith.addf %138, %144 : vector<8x8xf32>
    %c6_i32 = arith.constant 6 : i32
    %146 = vector.broadcast %c6_i32 : i32 to vector<8x8xi32>
    %147 = arith.cmpi eq, %102, %146 : vector<8x8xi32>
    %cst_50 = arith.constant 0.000000e+00 : f32
    %148 = vector.shape_cast %99 : vector<8x1xf32> to vector<8x1xf32>
    %149 = vector.broadcast %148 : vector<8x1xf32> to vector<8x8xf32>
    %150 = vector.broadcast %cst_50 : f32 to vector<8x8xf32>
    %151 = arith.select %147, %149, %150 : vector<8x8xi1>, vector<8x8xf32>
    %152 = arith.addf %145, %151 : vector<8x8xf32>
    %c7_i32 = arith.constant 7 : i32
    %153 = vector.broadcast %c7_i32 : i32 to vector<8x8xi32>
    %154 = arith.cmpi eq, %102, %153 : vector<8x8xi32>
    %cst_51 = arith.constant 0.000000e+00 : f32
    %155 = vector.shape_cast %101 : vector<8x1xf32> to vector<8x1xf32>
    %156 = vector.broadcast %155 : vector<8x1xf32> to vector<8x8xf32>
    %157 = vector.broadcast %cst_51 : f32 to vector<8x8xf32>
    %158 = arith.select %154, %156, %157 : vector<8x8xi1>, vector<8x8xf32>
    %159 = arith.addf %152, %158 : vector<8x8xf32>
    %cst_52 = arith.constant dense<0.000000e+00> : vector<8xf32>
    %160 = vector.multi_reduction <add>, %159, %cst_52 [0] : vector<8x8xf32> to vector<8xf32>
    %161 = vector.shape_cast %160 : vector<8xf32> to vector<1x8xf32>
    %c0_53 = arith.constant 0 : index
    %c0_54 = arith.constant 0 : index
    %162 = vector.load %arg9[%c0_53, %c0_54] : memref<1x8xf32, #tpu.memory_space<vmem>>, vector<1x8xf32>
    tpu.vector_store %arg9[%c0_53, %c0_54], %161 {strides = array<i32>} : memref<1x8xf32, #tpu.memory_space<vmem>>, vector<1x8xf32>,
    return
  }
}

</mosaic_0001>

<llo_original>
// kernel: _forward_jit.1
$region0: #{_forward_jit.1}
  #allocation0 [shape = 'u32[]', space=smem, size = 0x4, offset = 0x4, fixed_abs, tag = 'smem constant byte address 0x4 - core index']
  #allocation1 [shape = 'u32[72,128]{1,0:T(1,128)}', space=vmem, size = 0x9000, scoped, tag = 'internal scratch']
  #allocation2 [shape = 'f32[1]{0:T(128)S(6)}', space=smem, size = 0x200, scoped, tag = 'scoped memory for _forward_jit.1']
  %s0 = inlined_call_operand.vmem [shape: s32[8,1], index: 0, kind: input, shape index: {}]
  %s1 = inlined_call_operand.vmem [shape: s32[8,128], index: 1, kind: input, shape index: {}]
  %s2 = inlined_call_operand.vmem [shape: s32[8,128], index: 2, kind: input, shape index: {}]
  %s3 = inlined_call_operand.vmem [shape: s32[8,128], index: 3, kind: input, shape index: {}]
  %s4 = inlined_call_operand.hbm [shape: s32[8,128], index: 4, kind: input, shape index: {}]
  %s5 = inlined_call_operand.hbm [shape: f32[8,128], index: 5, kind: input, shape index: {}]
  %s6 = inlined_call_operand.vmem [shape: f32[8,1], index: 6, kind: input, shape index: {}]
  %s7 = inlined_call_operand.vmem [shape: f32[8,1], index: 7, kind: input, shape index: {}]
  %s8 = inlined_call_operand.<no memory space> [shape: f32[1], index: 8, kind: input, shape index: {}]
  %s9 = inlined_call_operand.vmem [shape: f32[1,8], index: 9, kind: output, shape index: {}]
  %s10 = sld [smem:[#allocation0]]
  $region54: #{_forward_jit.1} parent=0
    _
  %s12 = ssub.s32 1, %s10
  %s13 = scalar_select 0, %s12, %s10
  %14 = sst [smem:[#allocation2]] %s8
  $region1: #{_forward_jit.1} parent=0
    #allocation3 [shape = 'u8[4096]{0}', space=vmem, size = 0x1000, scoped, tag = 'input window, operand 4, single buffered']
    #allocation4 [shape = 's32[1]{0}', space=sflag, size = 0x4, scoped, tag = 'scoped memory for _forward_jit.1']
    #allocation5 [shape = 'u8[4096]{0}', space=vmem, size = 0x1000, scoped, tag = 'input window, operand 5, single buffered']
    #allocation6 [shape = 's32[1]{0}', space=sflag, size = 0x4, scoped, tag = 'scoped memory for _forward_jit.1']
    %15 = vsyncpa [#allocation4], 0
    %16 = vsyncpa [#allocation6], 0
    // Predicated region
    $region2: #{_forward_jit.1} parent=1 // pred_check
      _
    $region3: #{_forward_jit.1} parent=1 // pred_check_branch
      %18 = sbr.rel (0) target = $region5
    $region4: #{_forward_jit.1} parent=1 // pred_region
      _
    $region5: #{_forward_jit.1} parent=1 // pred_fallthru
      _
    // Predicated region
    $region6: #{_forward_jit.1} parent=1 // pred_check
      _
    $region7: #{_forward_jit.1} parent=1 // pred_check_branch
      %20 = sbr.rel (0) target = $region9
    $region8: #{_forward_jit.1} parent=1 // pred_region
      _
    $region9: #{_forward_jit.1} parent=1 // pred_fallthru
      _
    // Predicated region
    $region10: #{_forward_jit.1} parent=1 // pred_check
      _
    $region11: #{_forward_jit.1} parent=1 // pred_check_branch
      %22 = sbr.rel (0) target = $region13
    $region12: #{_forward_jit.1} parent=1 // pred_region
      _
    $region13: #{_forward_jit.1} parent=1 // pred_fallthru
      _
    // Predicated region
    $region14: #{_forward_jit.1} parent=1 // pred_check
      _
    $region15: #{_forward_jit.1} parent=1 // pred_check_branch
      %24 = sbr.rel (0) target = $region17
    $region16: #{_forward_jit.1} parent=1 // pred_region
      _
    $region17: #{_forward_jit.1} parent=1 // pred_fallthru
      _
    // Predicated region
    $region18: #{_forward_jit.1} parent=1 // pred_check
      _
    $region19: #{_forward_jit.1} parent=1 // pred_check_branch
      %26 = sbr.rel (0) target = $region21
    $region20: #{_forward_jit.1} parent=1 // pred_region
      %28 = vsyncadd [#allocation4], 0
      %s30 = sshll.u32 %s4, 4
      %s31 = int_to_ptr.hbm [resolvable:$true] %s30
      %s32 = sshll.u32 [#allocation3], 4
      %s33 = int_to_ptr.vmem [resolvable:$true] %s32
      %35 = dma.hbm_to_vmem [thread:$0]  %s31, 128, %s33, [#allocation4]
    $region21: #{_forward_jit.1} parent=1 // pred_fallthru
      _
    // Predicated region
    $region22: #{_forward_jit.1} parent=1 // pred_check
      _
    $region23: #{_forward_jit.1} parent=1 // pred_check_branch
      %37 = sbr.rel (0) target = $region25
    $region24: #{_forward_jit.1} parent=1 // pred_region
      %39 = vsyncadd [#allocation6], 0
      %s41 = sshll.u32 %s5, 4
      %s42 = int_to_ptr.hbm [resolvable:$true] %s41
      %s43 = sshll.u32 [#allocation5], 4
      %s44 = int_to_ptr.vmem [resolvable:$true] %s43
      %46 = dma.hbm_to_vmem [thread:$0]  %s42, 128, %s44, [#allocation6]
    $region25: #{_forward_jit.1} parent=1 // pred_fallthru
      _
    // Predicated region
    $region26: #{_forward_jit.1} parent=1 // pred_check
      _
    $region27: #{_forward_jit.1} parent=1 // pred_check_branch
      %48 = sbr.rel (0) target = $region29
    $region28: #{_forward_jit.1} parent=1 // pred_region
      _
    $region29: #{_forward_jit.1} parent=1 // pred_fallthru
      _
    // Predicated region
    $region30: #{_forward_jit.1} parent=1 // pred_check
      _
    $region31: #{_forward_jit.1} parent=1 // pred_check_branch
      %50 = sbr.rel (0) target = $region33
    $region32: #{_forward_jit.1} parent=1 // pred_region
      _
    $region33: #{_forward_jit.1} parent=1 // pred_fallthru
      _
    // Predicated region
    $region34: #{_forward_jit.1} parent=1 // pred_check
      _
    $region35: #{_forward_jit.1} parent=1 // pred_check_branch
      %52 = sbr.rel (0) target = $region37
    $region36: #{_forward_jit.1} parent=1 // pred_region
      _
    $region37: #{_forward_jit.1} parent=1 // pred_fallthru
      _
    // Predicated region
    $region38: #{_forward_jit.1} parent=1 // pred_check
      _
    $region39: #{_forward_jit.1} parent=1 // pred_check_branch
      %54 = sbr.rel (0) target = $region41
    $region40: #{_forward_jit.1} parent=1 // pred_region
      %56 = dma.done [#allocation4], 128
    $region41: #{_forward_jit.1} parent=1 // pred_fallthru
      _
    // Predicated region
    $region42: #{_forward_jit.1} parent=1 // pred_check
      _
    $region43: #{_forward_jit.1} parent=1 // pred_check_branch
      %58 = sbr.rel (0) target = $region45
    $region44: #{_forward_jit.1} parent=1 // pred_region
      %60 = dma.done [#allocation6], 128
    $region45: #{_forward_jit.1} parent=1 // pred_fallthru
      _
    %v61 = vlaneseq
    %v62 = vand.u32 %v61, 127
    %v63 = vld [vmem:[%s0] sm:$0xff]
    %64 = vset.pattern.permute.xlu0 0
    %65 = vperm.xlu0 %64, %v63
    %v66 = vpop.permute.xlu0 %65
    %vm67 = vcmp.lt.s32.totalorder %v62, %v66
    %v68 = vld [vmem:[%s1] sm:$0xff]
    %v69 = vld [vmem:[%s2] sm:$0xff]
    %v70 = vld [vmem:[%s3] sm:$0xff]
    %v71 = vld [vmem:[#allocation3] sm:$0xff]
    %vm72 = vcmp.ne.s32.totalorder %v68, %v69
    %vm73 = vmand %vm72, %vm67
    %v74 = vsel %vm73, 1, 0
    %v75 = vcvt.s32.f32 %v74
    %76 = vadd.xlane.f32.xlu0 %v75
    %v77 = vpop.xlane.xlu0 %76
    %vm78 = vcmp.ne.s32.totalorder %v68, %v70
    %vm79 = vmand %vm78, %vm67
    %v80 = vsel %vm79, 1, 0
    %v81 = vcvt.s32.f32 %v80
    %82 = vadd.xlane.f32.xlu0 %v81
    %v83 = vpop.xlane.xlu0 %82
    %vm84 = vcmp.eq.s32.totalorder %v69, %v70
    %vm85 = vmand %vm84, %vm67
    %v86 = vsel %vm85, 1, 0
    %v87 = vcvt.s32.f32 %v86
    %88 = vadd.xlane.f32.xlu0 %v87
    %v89 = vpop.xlane.xlu0 %88
    %v90 = vmul.f32 %v89, 0.01
    %v91 = vcvt.s32.f32 %v63
    %vm92 = vcmp.eq.s32.totalorder %v71, 0
    %vm93 = vmand %vm92, %vm67
    %v94 = vsel %vm93, 1, 0
    %v95 = vcvt.s32.f32 %v94
    %96 = vadd.xlane.f32.xlu0 %v95
    %v97 = vpop.xlane.xlu0 %96
    %v98 = vsub.f32 0.0, %v97
    %v99 = vrcp.pop %v91
    %v100 = vmul.f32 %v91, %v99
    %v101 = vsub.f32 1.0, %v100
    %v102 = vmul.f32 %v99, %v101
    %v103 = vadd.f32 %v99, %v102
    %vm104 = vweird.f32 %v91
    %vm105 = vweird.f32 %v99
    %vm106 = vmor %vm104, %vm105
    %v107 = vsel %vm106, %v99, %v103
    %v108 = vand.u32 2147483647, %v91
    %vm109 = vcmp.eq.f32.partialorder %v108, 8.507059e+37
    %v110 = vand.u32 %v91, 2147483648
    %v111 = vor.u32 1.1754944e-38, %v110
    %v112 = vsel %vm109, %v111, %v107
    %v113 = vmul.f32 %v98, %v112
    %v114 = vld [vmem:[%s6] sm:$0xff]
    %v115 = vld [vmem:[%s7] sm:$0xff]
    %v116 = vmul.f32 %v115, 1.442695
    %v117 = vpow.pop %v116
    %v118 = vsub.f32 0.0, %v117
    %v119 = vmul.f32 %v118, 0.5
    %v120 = vadd.f32 %v114, %v119
    %v121 = vmul.f32 %v77, 2.0
    %v122 = vadd.f32 %v120, %v121
    %v123 = vmul.f32 %v83, 2.0
    %v124 = vadd.f32 %v122, %v123
    %v125 = vadd.f32 %v124, %v90
    %v126 = vmul.f32 %v113, 3.0
    %v127 = vadd.f32 %v125, %v126
    %v128 = vmul.f32 %v127, 0.001
    %vm129 = vcmp.le.s32.totalorder %v62, %v66
    %v130 = vsel %vm129, 1, 0
    %v131 = vcvt.s32.f32 %v130
    %v132 = vld [vmem:[#allocation5] sm:$0xff]
    %v133 = vmul.f32 %v132, %v131
    %134 = vadd.xlane.f32.xlu0 %v133
    %v135 = vpop.xlane.xlu0 %134
    %v136 = vadd.f32 %v91, 1.0
    %v137 = vmin.f32 %v136, 128.0
    %vm138 = vcmask 7168
    %v139 = vsel %vm138, %v137, 0.0
    %140 = vadd.xlane.f32.xlu0 %v139
    %v141 = vpop.xlane.xlu0 %140
    %v142 = vrot.slane %v141, 4
    %v143 = vadd.f32 %v141, %v142
    %v144 = vrot.slane %v143, 2
    %v145 = vadd.f32 %v143, %v144
    %v146 = vrot.slane %v145, 1
    %v147 = vadd.f32 %v145, %v146
    %s148 = vtos %v147
    %s149 = sld [smem:[#allocation2]]
    %v150 = vsub.f32 0.0, %v135
    %v151 = vstv %s149
    %v152 = vsub.f32 %v128, %v151
    %v153 = vmul.f32 %v150, %v152
    %v154 = vstv %s148
    %v155 = vrcp.pop %v154
    %v156 = vmul.f32 %v154, %v155
    %v157 = vsub.f32 1.0, %v156
    %v158 = vmul.f32 %v155, %v157
    %v159 = vadd.f32 %v155, %v158
    %vm160 = vweird.f32 %v154
    %vm161 = vweird.f32 %v155
    %vm162 = vmor %vm160, %vm161
    %v163 = vsel %vm162, %v155, %v159
    %v164 = vand.u32 2147483647, %v154
    %vm165 = vcmp.eq.f32.partialorder %v164, 8.507059e+37
    %v166 = vand.u32 %v154, 2147483648
    %v167 = vor.u32 1.1754944e-38, %v166
    %v168 = vsel %vm165, %v167, %v163
    %s169 = vtos %v168
    %v170 = vstv %s169
    %v171 = vmul.f32 %v153, %v170
    %v172 = vmul.f32 %v77, 0.25
    %v173 = vmul.f32 %v83, 0.25
    %v174 = vmul.f32 %v90, 0.125
    %v175 = vmul.f32 %v114, 0.125
    %v176 = vmul.f32 %v118, 0.0625
    %v177 = vmul.f32 %v113, 0.375
    %v178 = vmul.f32 %v128, 0.125
    %vm179 = vcmp.eq.s32.totalorder %v62, 0
    %181 = vset.pattern.permute.xlu0 0
    %182 = vperm.xlu0 %181, %v171
    %v183 = vpop.permute.xlu0 %182
    %v185 = vsel %vm179, %v183, 0.0
    %v186 = vadd.f32 %v185, 0.0
    %vm187 = vcmp.eq.s32.totalorder %v62, 1
    %v188 = vsel %vm187, %v172, 0.0
    %v189 = vadd.f32 %v186, %v188
    %vm190 = vcmp.eq.s32.totalorder %v62, 2
    %v191 = vsel %vm190, %v173, 0.0
    %v192 = vadd.f32 %v189, %v191
    %vm193 = vcmp.eq.s32.totalorder %v62, 3
    %v194 = vsel %vm193, %v174, 0.0
    %v195 = vadd.f32 %v192, %v194
    %vm196 = vcmp.eq.s32.totalorder %v62, 4
    %198 = vset.pattern.permute.xlu0 0
    %199 = vperm.xlu0 %198, %v175
    %v200 = vpop.permute.xlu0 %199
    %v202 = vsel %vm196, %v200, 0.0
    %v203 = vadd.f32 %v195, %v202
    %vm204 = vcmp.eq.s32.totalorder %v62, 5
    %206 = vset.pattern.permute.xlu0 0
    %207 = vperm.xlu0 %206, %v176
    %v208 = vpop.permute.xlu0 %207
    %v210 = vsel %vm204, %v208, 0.0
    %v211 = vadd.f32 %v203, %v210
    %vm212 = vcmp.eq.s32.totalorder %v62, 6
    %214 = vset.pattern.permute.xlu0 0
    %215 = vperm.xlu0 %214, %v177
    %v216 = vpop.permute.xlu0 %215
    %v218 = vsel %vm212, %v216, 0.0
    %v219 = vadd.f32 %v211, %v218
    %vm220 = vcmp.eq.s32.totalorder %v62, 7
    %222 = vset.pattern.permute.xlu0 0
    %223 = vperm.xlu0 %222, %v178
    %v224 = vpop.permute.xlu0 %223
    %v226 = vsel %vm220, %v224, 0.0
    %v227 = vadd.f32 %v219, %v226
    %vm228 = vcmask 64512
    %v229 = vsel %vm228, %v227, 0.0
    %v230 = vrot.slane %v229, 4
    %v231 = vadd.f32 %v229, %v230
    %v232 = vrot.slane %v231, 2
    %v233 = vadd.f32 %v231, %v232
    %v234 = vrot.slane %v233, 1
    %v235 = vadd.f32 %v233, %v234
    %vm236 = vcmask 57344
    %237 = vst.msk [vmem:[%s9] sm:$0x1] %vm236, %v235
    // Predicated region
    $region46: #{_forward_jit.1} parent=1 // pred_check
      _
    $region47: #{_forward_jit.1} parent=1 // pred_check_branch
      %239 = sbr.rel (0) target = $region49
    $region48: #{_forward_jit.1} parent=1 // pred_region
      _
    $region49: #{_forward_jit.1} parent=1 // pred_fallthru
      _
    // Predicated region
    $region50: #{_forward_jit.1} parent=1 // pred_check
      _
    $region51: #{_forward_jit.1} parent=1 // pred_check_branch
      %241 = sbr.rel (0) target = $region53
    $region52: #{_forward_jit.1} parent=1 // pred_region
      _
    $region53: #{_forward_jit.1} parent=1 // pred_fallthru
      _
    %242 = vsyncpa [#allocation4], 1
    %243 = vsyncpa [#allocation6], 1

</llo_original>
